<compile_context>
chip_gen: v7x
topology: tpu7x:2x2x1
jax: 0.10.0
libtpu: 0.0.40
codegen_flags: <defaults>
</compile_context>

<pallas_src>
import functools

import jax
import jax.numpy as jnp
from jax.experimental import pallas as pl
from jax.experimental.pallas import tpu as pltpu

_LANE = 128
_SUBLANE = 8
# Portable VMEM budgets: v5e/v6e have 128 MiB physical, v7x has 64 MiB.
_VMEM_LIMIT_BYTES = 48 * 1024 * 1024          # <= v7x physical, fine everywhere
_FUSED_SLAB_BUDGET_BYTES = 40 * 1024 * 1024   # dbl-buffered in/out + f32 temps
_STREAM_BUDGET_BYTES = 16 * 1024 * 1024       # streamed buffers, fallback path


def _row_align(itemsize):
    # 8 sublanes of 32-bit; sub-32-bit dtypes pack along sublanes.
    return max(_SUBLANE, 32 // itemsize)


def _pick_fused_r_tile(R_pad, S_pad, row_align, itemsize):
    """Row tile for the fused single-pass kernel, or None if it can't fit."""
    # Per row of slab: 2x input buffers + 2x output buffers (double-buffered
    # pipeline) + ~3 f32-sized in-kernel temporaries (centered x, mask, etc.).
    per_row = S_pad * (2 * itemsize + 2 * itemsize + 3 * 4)
    max_rows = _FUSED_SLAB_BUDGET_BYTES // per_row
    if max_rows < row_align:
        return None
    k = R_pad // row_align                      # row tiles available
    cap = max_rows // row_align                 # row tiles that fit VMEM
    if k >= 2:
        # Keep >= 2 parallel grid blocks so v7x's second TensorCore has work.
        cap = min(cap, max(1, k // 2))
    best = 1
    for d in range(1, k + 1):
        if k % d == 0 and d <= cap:
            best = d
    return best * row_align


def _pick_s_tile(S_pad, r_tile, bytes_per_elem, budget):
    """128-aligned divisor of S_pad sized against a streaming VMEM budget."""
    max_elems = max(budget // bytes_per_elem, r_tile * _LANE)
    max_s = max(_LANE, (max_elems // r_tile) // _LANE * _LANE)
    s_tile = min(S_pad, max_s)
    while S_pad % s_tile:
        s_tile -= _LANE
    return s_tile


# ---------------------------------------------------------------------------
# Fused single-pass kernel: stats + normalize + affine on a resident slab.
# ---------------------------------------------------------------------------
def _fused_kernel(x_ref, ss_ref, o_ref, *, s_valid, s_padded, eps):
    # x_ref: (r_tile, S_pad); ss_ref: (r_tile, 2) packed (scale, shift).
    x = x_ref[...].astype(jnp.float32)
    if s_padded:
        col = jax.lax.broadcasted_iota(jnp.int32, x.shape, 1)
        valid = col < s_valid
        xs = jnp.where(valid, x, 0.0)
    else:
        xs = x
    inv_n = jnp.float32(1.0 / s_valid)
    mean = jnp.sum(xs, axis=-1, keepdims=True) * inv_n            # (r, 1)
    xc = x - mean                                                 # centered
    if s_padded:
        xc = jnp.where(valid, xc, 0.0)
    var = jnp.sum(xc * xc, axis=-1, keepdims=True) * inv_n        # (r, 1)
    inv_std = jax.lax.rsqrt(var + jnp.float32(eps))
    scale = ss_ref[:, 0:1].astype(jnp.float32)
    shift = ss_ref[:, 1:2].astype(jnp.float32)
    o_ref[...] = ((scale * inv_std) * xc + shift).astype(o_ref.dtype)


# ---------------------------------------------------------------------------
# Two-pass fallback (when an 8-row x S_pad slab does not fit VMEM).
# ---------------------------------------------------------------------------
def _stats_kernel(x_ref, stat_ref):
    # stat_ref: (r_tile, 2) resident accumulator, column 0 = sum, 1 = sumsq.
    @pl.when(pl.program_id(1) == 0)
    def _():
        stat_ref[...] = jnp.zeros_like(stat_ref)

    x = x_ref[...].astype(jnp.float32)                            # (r, s_tile)
    s = jnp.sum(x, axis=-1, keepdims=True)                        # (r, 1)
    q = jnp.sum(x * x, axis=-1, keepdims=True)                    # (r, 1)
    col = jax.lax.broadcasted_iota(jnp.int32, stat_ref.shape, 1)  # (r, 2)
    stat_ref[...] += jnp.where(col == 0, s, q)


def _apply_kernel(x_ref, ab_ref, o_ref):
    # out = a * x + b with per-row fused coefficients; pure VPU streaming.
    a = ab_ref[:, 0:1]
    b = ab_ref[:, 1:2]
    x = x_ref[...].astype(jnp.float32)
    o_ref[...] = (a * x + b).astype(o_ref.dtype)


# ---------------------------------------------------------------------------
# Wrapper
# ---------------------------------------------------------------------------
def adaptive_instance_norm_3d(x, style, weight, bias, epsilon=1e-8,
                              force_two_pass=False):
    """x: (B, C, D, H, W), style: (B, L), weight: (2C, L), bias: (2C,)."""
    B, C, D, H, W = x.shape
    S = D * H * W
    R = B * C
    itemsize = jnp.dtype(x.dtype).itemsize
    row_align = _row_align(itemsize)
    S_pad = pl.cdiv(S, _LANE) * _LANE
    R_pad = pl.cdiv(R, row_align) * row_align
    pad_r, pad_s = R_pad - R, S_pad - S

    x2 = x.reshape(R, S)
    if pad_r or pad_s:
        x2 = jnp.pad(x2, ((0, pad_r), (0, pad_s)))

    # Degenerate style affine (tiny (B,L)x(L,2C) matmul) stays in XLA.
    aff = (style.astype(jnp.float32) @ weight.astype(jnp.float32).T
           + bias.astype(jnp.float32))                            # (B, 2C)
    scale = aff[:, :C].reshape(R)
    shift = aff[:, C:].reshape(R)
    if pad_r:
        scale = jnp.pad(scale, (0, pad_r))
        shift = jnp.pad(shift, (0, pad_r))

    # Alias the output onto x2 only when x2 is a fresh padded copy.
    alias = {0: 0} if (pad_r or pad_s) else {}

    r_tile = None
    if not force_two_pass:
        r_tile = _pick_fused_r_tile(R_pad, S_pad, row_align, itemsize)

    if r_tile is not None:
        # ---- Fused single pass: 1 read + 1 write of x ----
        ss = jnp.stack([scale, shift], axis=-1)                   # (R_pad, 2)
        n_r = R_pad // r_tile
        out = pl.pallas_call(
            functools.partial(_fused_kernel, s_valid=S,
                              s_padded=bool(pad_s), eps=epsilon),
            out_shape=jax.ShapeDtypeStruct((R_pad, S_pad), x.dtype),
            grid_spec=pltpu.PrefetchScalarGridSpec(
                num_scalar_prefetch=0,
                grid=(n_r,),
                in_specs=[
                    pl.BlockSpec((r_tile, S_pad), lambda i: (i, 0)),
                    pl.BlockSpec((r_tile, 2), lambda i: (i, 0)),
                ],
                out_specs=pl.BlockSpec((r_tile, S_pad), lambda i: (i, 0))),
            compiler_params=pltpu.CompilerParams(
                dimension_semantics=("parallel",),
                vmem_limit_bytes=_VMEM_LIMIT_BYTES),
            input_output_aliases=alias,
        )(x2, ss)
    else:
        # ---- Two-pass fallback: streaming stats, then streaming apply ----
        # TODO(synk): fallback variance uses E[x^2]-E[x]^2 (clamped); very
        # large-mean inputs may lose precision vs the centered reference.
        r_tile = row_align
        n_r = R_pad // r_tile

        # Pass 1 streams only x -> budget over 2 input buffers + f32 temps.
        s_tile_stats = _pick_s_tile(S_pad, r_tile, 2 * itemsize + 2 * 4,
                                    _STREAM_BUDGET_BYTES)
        stats = pl.pallas_call(
            _stats_kernel,
            out_shape=jax.ShapeDtypeStruct((R_pad, 2), jnp.float32),
            grid_spec=pltpu.PrefetchScalarGridSpec(
                num_scalar_prefetch=0,
                grid=(n_r, S_pad // s_tile_stats),
                in_specs=[pl.BlockSpec((r_tile, s_tile_stats),
                                       lambda r, s: (r, s))],
                out_specs=pl.BlockSpec((r_tile, 2), lambda r, s: (r, 0))),
            compiler_params=pltpu.CompilerParams(
                dimension_semantics=("parallel", "arbitrary"),
                vmem_limit_bytes=_VMEM_LIMIT_BYTES),
        )(x2)

        # Tiny per-row finalize math in XLA (zero-padded cols add nothing to
        # sum/sumsq; we divide by the true S).
        inv_n = jnp.float32(1.0 / S)
        mean = stats[:, 0] * inv_n
        var = jnp.maximum(stats[:, 1] * inv_n - mean * mean, 0.0)
        inv_std = jax.lax.rsqrt(var + jnp.float32(epsilon))
        a = scale * inv_std
        b = shift - a * mean
        ab = jnp.stack([a, b], axis=-1)                           # (R_pad, 2)

        # Pass 2 streams x in and out -> 4 buffers + f32 temp.
        s_tile_apply = _pick_s_tile(S_pad, r_tile,
                                    2 * itemsize + 2 * itemsize + 4,
                                    _STREAM_BUDGET_BYTES)
        out = pl.pallas_call(
            _apply_kernel,
            out_shape=jax.ShapeDtypeStruct((R_pad, S_pad), x.dtype),
            grid_spec=pltpu.PrefetchScalarGridSpec(
                num_scalar_prefetch=0,
                grid=(n_r, S_pad // s_tile_apply),
                in_specs=[
                    pl.BlockSpec((r_tile, s_tile_apply), lambda r, s: (r, s)),
                    pl.BlockSpec((r_tile, 2), lambda r, s: (r, 0)),
                ],
                out_specs=pl.BlockSpec((r_tile, s_tile_apply),
                                       lambda r, s: (r, s))),
            compiler_params=pltpu.CompilerParams(
                dimension_semantics=("parallel", "parallel"),
                vmem_limit_bytes=_VMEM_LIMIT_BYTES),
            input_output_aliases=alias,
        )(x2, ab)

    if pad_r or pad_s:
        out = out[:R, :S]
    return out.reshape(B, C, D, H, W)


def reference(x, style, weight, bias, epsilon=1e-8):
    C = x.shape[1]
    mean = x.mean(axis=(-1, -2, -3), keepdims=True)
    xc = x - mean
    std = jnp.sqrt(jnp.mean(xc ** 2, axis=(-1, -2, -3), keepdims=True) + epsilon)
    xn = xc / std
    aff = style @ weight.T + bias                     # (B, 2C)
    aff = aff[:, :, None, None, None]
    scale, b = aff[:, :C], aff[:, C:]
    return scale * xn + b


if __name__ == "__main__":
    eps = 1e-8
    key = jax.random.PRNGKey(0)

    def make_case(key, B, C, D, H, W, latent):
        kx, ks, kw, kb = jax.random.split(key, 4)
        x = jax.random.normal(kx, (B, C, D, H, W), dtype=jnp.float32)
        style = jax.random.normal(ks, (B, latent), dtype=jnp.float32)
        # Deterministic nn.Linear(latent, 2C) init: U(-1/sqrt(L), 1/sqrt(L)).
        bound = 1.0 / jnp.sqrt(jnp.float32(latent))
        weight = jax.random.uniform(kw, (2 * C, latent), jnp.float32,
                                    -bound, bound)
        bias = jax.random.uniform(kb, (2 * C,), jnp.float32, -bound, bound)
        return x, style, weight, bias

    k1, k2 = jax.random.split(key)

    # Case 1: aligned shapes, fused single-pass path.
    x, style, weight, bias = make_case(k1, 2, 4, 8, 8, 8, 32)
    out = jax.block_until_ready(
        adaptive_instance_norm_3d(x, style, weight, bias, epsilon=eps))
    ref = reference(x, style, weight, bias, epsilon=eps)
    assert out.shape == x.shape
    assert jnp.allclose(out, ref, atol=1e-5, rtol=1e-5), "fused path mismatch"

    # Case 2: ragged shapes (row + lane padding, masked stats), fused path.
    x, style, weight, bias = make_case(k2, 2, 3, 5, 6, 7, 16)
    out = jax.block_until_ready(
        adaptive_instance_norm_3d(x, style, weight, bias, epsilon=eps))
    ref = reference(x, style, weight, bias, epsilon=eps)
    assert jnp.allclose(out, ref, atol=1e-5, rtol=1e-5), "padded fused mismatch"

    # Case 3: same ragged shapes through the two-pass streaming fallback.
    out = jax.block_until_ready(
        adaptive_instance_norm_3d(x, style, weight, bias, epsilon=eps,
                                  force_two_pass=True))
    assert jnp.allclose(out, ref, atol=1e-5, rtol=1e-5), "two-pass mismatch"

    print("KERNEL_OK")
</pallas_src>

<mosaic_0001>
module attributes {stable_mosaic.version = 11 : i64} {
  func.func @_fused_kernel(%arg0: i32, %arg1: memref<8x512xf32, #tpu.memory_space<vmem>>, %arg2: memref<8x2xf32, #tpu.memory_space<vmem>>, %arg3: memref<8x512xf32, #tpu.memory_space<vmem>>) attributes {dimension_semantics = [#tpu.dimension_semantics<parallel>], iteration_bounds = array<i64: 1>, scalar_prefetch = 0 : i64, scratch_operands = 0 : i64, tpu.core_type = #tpu.core_type<tc>, window_params = [{transform_indices = @transform_0, window_bounds = array<i64: 8, 512>}, {transform_indices = @transform_1, window_bounds = array<i64: 8, 2>}, {transform_indices = @transform_2, window_bounds = array<i64: 8, 512>}]} {
    %c0 = arith.constant 0 : index
    %c0_0 = arith.constant 0 : index
    %0 = vector.load %arg1[%c0, %c0_0] : memref<8x512xf32, #tpu.memory_space<vmem>>, vector<8x512xf32>
    %cst = arith.constant dense<0.000000e+00> : vector<8xf32>
    %1 = vector.multi_reduction <add>, %0, %cst [1] : vector<8x512xf32> to vector<8xf32>
    %2 = vector.shape_cast %1 : vector<8xf32> to vector<8x1xf32>
    %cst_1 = arith.constant 0.001953125 : f32
    %3 = vector.broadcast %cst_1 : f32 to vector<8x1xf32>
    %4 = arith.mulf %2, %3 : vector<8x1xf32>
    %5 = vector.broadcast %4 : vector<8x1xf32> to vector<8x512xf32>
    %6 = arith.subf %0, %5 : vector<8x512xf32>
    %7 = arith.mulf %6, %6 : vector<8x512xf32>
    %cst_2 = arith.constant dense<0.000000e+00> : vector<8xf32>
    %8 = vector.multi_reduction <add>, %7, %cst_2 [1] : vector<8x512xf32> to vector<8xf32>
    %9 = vector.shape_cast %8 : vector<8xf32> to vector<8x1xf32>
    %cst_3 = arith.constant 0.001953125 : f32
    %10 = vector.broadcast %cst_3 : f32 to vector<8x1xf32>
    %11 = arith.mulf %9, %10 : vector<8x1xf32>
    %cst_4 = arith.constant 9.99999993E-9 : f32
    %12 = vector.broadcast %cst_4 : f32 to vector<8x1xf32>
    %13 = arith.addf %11, %12 : vector<8x1xf32>
    %14 = math.rsqrt %13 : vector<8x1xf32>
    %c0_5 = arith.constant 0 : index
    %c0_6 = arith.constant 0 : index
    %15 = vector.load %arg2[%c0_5, %c0_6] : memref<8x2xf32, #tpu.memory_space<vmem>>, vector<8x1xf32>
    %c0_7 = arith.constant 0 : index
    %c1 = arith.constant 1 : index
    %16 = vector.load %arg2[%c0_7, %c1] : memref<8x2xf32, #tpu.memory_space<vmem>>, vector<8x1xf32>
    %17 = arith.mulf %15, %14 : vector<8x1xf32>
    %18 = vector.broadcast %17 : vector<8x1xf32> to vector<8x512xf32>
    %19 = arith.mulf %18, %6 : vector<8x512xf32>
    %20 = vector.broadcast %16 : vector<8x1xf32> to vector<8x512xf32>
    %21 = arith.addf %19, %20 : vector<8x512xf32>
    %c0_8 = arith.constant 0 : index
    %c0_9 = arith.constant 0 : index
    %22 = vector.load %arg3[%c0_8, %c0_9] : memref<8x512xf32, #tpu.memory_space<vmem>>, vector<8x512xf32>
    tpu.vector_store %arg3[%c0_8, %c0_9], %21 {strides = array<i32>} : memref<8x512xf32, #tpu.memory_space<vmem>>, vector<8x512xf32>,
    return
  }
  func.func @transform_0(%arg0: i32) -> (i32, i32) {
    %c0_i32 = arith.constant 0 : i32
    %c0_i32_0 = arith.constant 0 : i32
    return %arg0, %c0_i32 : i32, i32
  }
  func.func @transform_1(%arg0: i32) -> (i32, i32) {
    %c0_i32 = arith.constant 0 : i32
    %c0_i32_0 = arith.constant 0 : i32
    return %arg0, %c0_i32 : i32, i32
  }
  func.func @transform_2(%arg0: i32) -> (i32, i32) {
    %c0_i32 = arith.constant 0 : i32
    %c0_i32_0 = arith.constant 0 : i32
    return %arg0, %c0_i32 : i32, i32
  }
}

</mosaic_0001>

<llo_original>
// kernel: tpu_custom_call.1
$region0: #{tpu_custom_call.1}
  #allocation0 [shape = 'u32[]', space=smem, size = 0x4, offset = 0x4, fixed_abs, tag = 'smem constant byte address 0x4 - core index']
  #allocation1 [shape = 'u32[144,128]{1,0:T(1,128)}', space=vmem, size = 0x12000, scoped, tag = 'internal scratch']
  %s0 = inlined_call_operand.hbm [shape: f32[8,512], index: 0, kind: input, shape index: {}]
  %s1 = inlined_call_operand.vmem [shape: f32[8,2], index: 1, kind: input, shape index: {}]
  %s2 = inlined_call_operand.hbm [shape: f32[8,512], index: 2, kind: output, shape index: {}]
  %s3 = sld [smem:[#allocation0]]
  $region22: #{tpu_custom_call.1} parent=0
    _
  %s5 = ssub.s32 1, %s3
  %s6 = scalar_select 0, %s5, %s3
  $region1: #{tpu_custom_call.1} parent=0
    #allocation2 [shape = 'u8[16384]{0}', space=vmem, size = 0x4000, scoped, tag = 'input window, operand 0, single buffered']
    #allocation3 [shape = 's32[1]{0}', space=sflag, size = 0x4, scoped, tag = 'scoped memory for tpu_custom_call.1']
    #allocation4 [shape = 's32[1]{0}', space=sflag, size = 0x4, scoped, tag = 'scoped memory for tpu_custom_call.1']
    #allocation5 [shape = 'u8[16384]{0}', space=vmem, size = 0x4000, scoped, tag = 'output window, operand 0, single buffered']
    %7 = vsyncpa [#allocation3], 0
    %8 = vsyncpa [#allocation4], 0
    // Predicated region
    $region2: #{tpu_custom_call.1} parent=1 // pred_check
      _
    $region3: #{tpu_custom_call.1} parent=1 // pred_check_branch
      %10 = sbr.rel (0) target = $region5
    $region4: #{tpu_custom_call.1} parent=1 // pred_region
      %s12 = ssub.s32 512, 512
      %13 = vsyncadd [#allocation3], %s12
      %s15 = sshll.u32 [#allocation2], 4
      %s16 = int_to_ptr.vmem [resolvable:$true] %s15
      %18 = dma.hbm_to_vmem [thread:$0]  %s0, 512, %s16, [#allocation3]
    $region5: #{tpu_custom_call.1} parent=1 // pred_fallthru
      _
    // Predicated region
    $region6: #{tpu_custom_call.1} parent=1 // pred_check
      _
    $region7: #{tpu_custom_call.1} parent=1 // pred_check_branch
      %20 = sbr.rel (0) target = $region9
    $region8: #{tpu_custom_call.1} parent=1 // pred_region
      _
    $region9: #{tpu_custom_call.1} parent=1 // pred_fallthru
      _
    // Predicated region
    $region10: #{tpu_custom_call.1} parent=1 // pred_check
      _
    $region11: #{tpu_custom_call.1} parent=1 // pred_check_branch
      %22 = sbr.rel (0) target = $region13
    $region12: #{tpu_custom_call.1} parent=1 // pred_region
      %23 = dma.done [#allocation3], 512
    $region13: #{tpu_custom_call.1} parent=1 // pred_fallthru
      _
    %v24 = vld [vmem:[#allocation2] sm:$0xff]
    %v25 = vld [vmem:[#allocation2 + $0x8] sm:$0xff]
    %v26 = vld [vmem:[#allocation2 + $0x10] sm:$0xff]
    %v27 = vld [vmem:[#allocation2 + $0x18] sm:$0xff]
    %v28 = vadd.f32 %v24, %v25
    %v29 = vadd.f32 %v28, %v26
    %v30 = vadd.f32 %v29, %v27
    %31 = vadd.xlane.f32.xlu0 %v30
    %v32 = vpop.xlane.xlu0 %31
    %v33 = vmul.f32 %v32, 0.001953125
    %v34 = vsub.f32 %v24, %v33
    %v35 = vsub.f32 %v25, %v33
    %v36 = vsub.f32 %v26, %v33
    %v37 = vsub.f32 %v27, %v33
    %v38 = vmul.f32 %v34, %v34
    %v39 = vmul.f32 %v35, %v35
    %v40 = vmul.f32 %v36, %v36
    %v41 = vmul.f32 %v37, %v37
    %v42 = vadd.f32 %v38, %v39
    %v43 = vadd.f32 %v42, %v40
    %v44 = vadd.f32 %v43, %v41
    %45 = vadd.xlane.f32.xlu0 %v44
    %v46 = vpop.xlane.xlu0 %45
    %v47 = vmul.f32 %v46, 0.001953125
    %v48 = vadd.f32 %v47, 1e-08
    %v49 = vrsqrt.pop %v48
    %v50 = vld [vmem:[%s1] sm:$0xff]
    %v51 = vmul.f32 %v50, %v49
    %53 = vset.pattern.permute.xlu0 0
    %54 = vperm.xlu0 %53, %v51
    %v55 = vpop.permute.xlu0 %54
    %v57 = vmul.f32 %v55, %v34
    %v58 = vmul.f32 %v55, %v35
    %v59 = vmul.f32 %v55, %v36
    %v60 = vmul.f32 %v55, %v37
    %62 = vset.pattern.permute.xlu0 1
    %63 = vperm.xlu0 %62, %v50
    %v64 = vpop.permute.xlu0 %63
    %v66 = vadd.f32 %v57, %v64
    %v67 = vadd.f32 %v58, %v64
    %v68 = vadd.f32 %v59, %v64
    %v69 = vadd.f32 %v60, %v64
    %70 = vst [vmem:[#allocation5] sm:$0xff] %v66
    %71 = vst [vmem:[#allocation5 + $0x8] sm:$0xff] %v67
    %72 = vst [vmem:[#allocation5 + $0x10] sm:$0xff] %v68
    %73 = vst [vmem:[#allocation5 + $0x18] sm:$0xff] %v69
    // Predicated region
    $region14: #{tpu_custom_call.1} parent=1 // pred_check
      _
    $region15: #{tpu_custom_call.1} parent=1 // pred_check_branch
      %75 = sbr.rel (0) target = $region17
    $region16: #{tpu_custom_call.1} parent=1 // pred_region
      %s77 = ssub.s32 512, 512
      %78 = vsyncadd [#allocation4], %s77
      %s80 = sshll.u32 [#allocation5], 4
      %s81 = int_to_ptr.vmem [resolvable:$true] %s80
      %83 = dma.vmem_to_hbm [thread:$0]  %s81, 512, %s2, [#allocation4]
    $region17: #{tpu_custom_call.1} parent=1 // pred_fallthru
      _
    // Predicated region
    $region18: #{tpu_custom_call.1} parent=1 // pred_check
      _
    $region19: #{tpu_custom_call.1} parent=1 // pred_check_branch
      %85 = sbr.rel (0) target = $region21
    $region20: #{tpu_custom_call.1} parent=1 // pred_region
      %86 = dma.done [#allocation4], 512
    $region21: #{tpu_custom_call.1} parent=1 // pred_fallthru
      _
    %87 = vsyncpa [#allocation3], 1
    %88 = vsyncpa [#allocation4], 1

</llo_original>
